<compile_context>
chip_gen: v5e
topology: v5e:2x2
jax: 0.10.0
libtpu: 0.0.40
codegen_flags: <defaults>
</compile_context>

<pallas_src>
import jax
import jax.numpy as jnp
from jax.experimental import pallas as pl
from jax.experimental.pallas import tpu as pltpu


def _decoder_kernel(x_ref, w_ref, b_ref, o_ref, acc_ref):
    """One grid step of the pooled-FC decoder.

    x_ref:   (tile_n, C, tile_hw)  input slab (any float dtype)
    w_ref:   (C, num_class)        weight.T pre-scaled by 1/(H*W), f32
    b_ref:   (1, num_class)        bias, f32
    o_ref:   (tile_n, num_class)   output block (revisited across the HW axis)
    acc_ref: (tile_n, C) f32       resident VMEM accumulator
    """
    hw_step = pl.program_id(1)

    @pl.when(hw_step == 0)
    def _init():
        acc_ref[...] = jnp.zeros_like(acc_ref)

    # Partial spatial sum for this slab (f32 accumulation).
    x = x_ref[...].astype(jnp.float32)
    acc_ref[...] += jnp.sum(x, axis=-1)

    @pl.when(hw_step == pl.num_programs(1) - 1)
    def _finalize():
        # FC on the MXU; pooling scale already folded into w_ref.
        logits = jnp.dot(acc_ref[...], w_ref[...],
                         preferred_element_type=jnp.float32)
        logits = logits + b_ref[...]
        o_ref[...] = logits.astype(o_ref.dtype)


def _pick_tiles(N, C, HW, itemsize):
    """Pick (tile_n, tile_hw) for the streaming reduction."""
    # Batch tile: multiple of 8 when possible (aligned output sublanes),
    # otherwise the full batch (BlockSpec full-extent dims are always legal).
    tile_n = 8 if (N % 8 == 0) else N

    # Spatial tile: large lane-dense multiple of 128 that divides HW while
    # keeping the double-buffered x slab under ~12 MiB (headroom for weights,
    # accumulator and Mosaic scratch within a 32 MiB scoped-VMEM budget).
    budget = 12 << 20
    for cand in (2048, 1024, 512, 256, 128):
        if HW % cand == 0 and 2 * tile_n * C * cand * itemsize <= budget:
            return tile_n, cand
    # Fallback: full spatial extent in one block (needed when HW is not a
    # multiple of 128, e.g. 7*7 feature maps).
    return tile_n, HW


def decoder_multi_classification(x, weight, bias):
    """
    x:      (N, C, H, W)   float32 or bfloat16
    weight: (num_class, C) PyTorch nn.Linear layout
    bias:   (num_class,)
    returns (N, num_class), same dtype as x
    """
    N, C, H, W = x.shape
    num_class = weight.shape[0]
    HW = H * W

    tile_n, tile_hw = _pick_tiles(N, C, HW, jnp.dtype(x.dtype).itemsize)
    grid = (N // tile_n, HW // tile_hw)

    x3 = x.reshape(N, C, HW)                               # glue reshape
    # Fold the average-pool 1/(H*W) into the read-once weight.
    w_scaled = (weight.T.astype(jnp.float32)) * (1.0 / HW)  # (C, num_class)
    b2 = bias.reshape(1, num_class).astype(jnp.float32)

    out = pl.pallas_call(
        _decoder_kernel,
        out_shape=jax.ShapeDtypeStruct((N, num_class), x.dtype),
        grid_spec=pltpu.PrefetchScalarGridSpec(
            num_scalar_prefetch=0,
            grid=grid,
            in_specs=[
                pl.BlockSpec((tile_n, C, tile_hw), lambda n, k: (n, 0, k)),
                pl.BlockSpec((C, num_class), lambda n, k: (0, 0)),
                pl.BlockSpec((1, num_class), lambda n, k: (0, 0)),
            ],
            out_specs=pl.BlockSpec((tile_n, num_class), lambda n, k: (n, 0)),
            scratch_shapes=[pltpu.VMEM((tile_n, C), jnp.float32)],
        ),
        compiler_params=pltpu.CompilerParams(
            dimension_semantics=("parallel", "arbitrary"),
            vmem_limit_bytes=32 << 20,
        ),
    )(x3, w_scaled, b2)
    return out


def _reference(x, weight, bias):
    pooled = jnp.mean(x.astype(jnp.float32), axis=(2, 3))   # (N, C)
    return (pooled @ weight.T.astype(jnp.float32)
            + bias.astype(jnp.float32)).astype(x.dtype)


def _run_case(key, N, C, H, W, num_class):
    kx, kw, kb = jax.random.split(key, 3)
    x = jax.random.normal(kx, (N, C, H, W), dtype=jnp.float32)
    bound = 1.0 / (C ** 0.5)
    weight = jax.random.uniform(kw, (num_class, C), minval=-bound,
                                maxval=bound, dtype=jnp.float32)
    bias = jax.random.uniform(kb, (num_class,), minval=-bound,
                              maxval=bound, dtype=jnp.float32)

    out = jax.block_until_ready(decoder_multi_classification(x, weight, bias))
    ref = _reference(x, weight, bias)
    assert out.shape == (N, num_class), out.shape
    assert jnp.allclose(out, ref, atol=2e-5, rtol=1e-4), \
        f"mismatch vs reference for shape {(N, C, H, W)}"


if __name__ == "__main__":
    key = jax.random.PRNGKey(0)
    k1, k2 = jax.random.split(key)

    # Small primary case (single grid step along HW).
    _run_case(k1, N=2, C=32, H=16, W=16, num_class=8)
    # Slightly larger case that exercises the multi-step spatial accumulation
    # path (HW=4096 -> tile_hw=2048 -> 2 reduction steps) and batch tile of 8.
    _run_case(k2, N=8, C=32, H=64, W=64, num_class=8)

    print("KERNEL_OK")
</pallas_src>

<mosaic_0001>
module attributes {stable_mosaic.version = 11 : i64} {
  func.func @_decoder_kernel(%arg0: i32, %arg1: i32, %arg2: memref<2x32x256xf32, #tpu.memory_space<vmem>>, %arg3: memref<32x8xf32, #tpu.memory_space<vmem>>, %arg4: memref<1x8xf32, #tpu.memory_space<vmem>>, %arg5: memref<2x8xf32, #tpu.memory_space<vmem>>, %arg6: memref<2x32xf32, #tpu.memory_space<vmem>>) attributes {dimension_semantics = [#tpu.dimension_semantics<parallel>, #tpu.dimension_semantics<arbitrary>], iteration_bounds = array<i64: 1, 1>, scalar_prefetch = 0 : i64, scratch_operands = 1 : i64, tpu.core_type = #tpu.core_type<tc>, window_params = [{transform_indices = @transform_0, window_bounds = array<i64: 2, 32, 256>}, {pipeline_mode = #tpu.pipeline_mode<synchronous>, transform_indices = @transform_1, window_bounds = array<i64: 32, 8>}, {pipeline_mode = #tpu.pipeline_mode<synchronous>, transform_indices = @transform_2, window_bounds = array<i64: 1, 8>}, {transform_indices = @transform_3, window_bounds = array<i64: 2, 8>}]} {
    %c0_i32 = arith.constant 0 : i32
    %0 = arith.cmpi eq, %arg1, %c0_i32 : i32
    %1 = arith.extui %0 : i1 to i32
    %c0_i32_0 = arith.constant 0 : i32
    %2 = arith.cmpi ne, %1, %c0_i32_0 : i32
    scf.if %2 {
      %cst_9 = arith.constant 0.000000e+00 : f32
      %11 = vector.broadcast %cst_9 : f32 to vector<2x32xf32>
      %c0_10 = arith.constant 0 : index
      %c0_11 = arith.constant 0 : index
      %12 = vector.load %arg6[%c0_10, %c0_11] : memref<2x32xf32, #tpu.memory_space<vmem>>, vector<2x32xf32>
      tpu.vector_store %arg6[%c0_10, %c0_11], %11 {strides = array<i32>} : memref<2x32xf32, #tpu.memory_space<vmem>>, vector<2x32xf32>,
    } else {
    }
    %c0 = arith.constant 0 : index
    %c0_1 = arith.constant 0 : index
    %c0_2 = arith.constant 0 : index
    %3 = vector.load %arg2[%c0, %c0_1, %c0_2] : memref<2x32x256xf32, #tpu.memory_space<vmem>>, vector<2x32x256xf32>
    %c0_3 = arith.constant 0 : index
    %c0_4 = arith.constant 0 : index
    %4 = vector.load %arg6[%c0_3, %c0_4] : memref<2x32xf32, #tpu.memory_space<vmem>>, vector<2x32xf32>
    %cst = arith.constant dense<0.000000e+00> : vector<2x32xf32>
    %5 = vector.multi_reduction <add>, %3, %cst [2] : vector<2x32x256xf32> to vector<2x32xf32>
    %6 = arith.addf %4, %5 : vector<2x32xf32>
    %c0_5 = arith.constant 0 : index
    %c0_6 = arith.constant 0 : index
    %7 = vector.load %arg6[%c0_5, %c0_6] : memref<2x32xf32, #tpu.memory_space<vmem>>, vector<2x32xf32>
    tpu.vector_store %arg6[%c0_5, %c0_6], %6 {strides = array<i32>} : memref<2x32xf32, #tpu.memory_space<vmem>>, vector<2x32xf32>,
    %c0_i32_7 = arith.constant 0 : i32
    %8 = arith.cmpi eq, %arg1, %c0_i32_7 : i32
    %9 = arith.extui %8 : i1 to i32
    %c0_i32_8 = arith.constant 0 : i32
    %10 = arith.cmpi ne, %9, %c0_i32_8 : i32
    scf.if %10 {
      %c0_9 = arith.constant 0 : index
      %c0_10 = arith.constant 0 : index
      %11 = vector.load %arg6[%c0_9, %c0_10] : memref<2x32xf32, #tpu.memory_space<vmem>>, vector<2x32xf32>
      %c0_11 = arith.constant 0 : index
      %c0_12 = arith.constant 0 : index
      %12 = vector.load %arg3[%c0_11, %c0_12] : memref<32x8xf32, #tpu.memory_space<vmem>>, vector<32x8xf32>
      %cst_13 = arith.constant dense<0.000000e+00> : vector<2x8xf32>
      %13 = tpu.matmul %11, %12, %cst_13 {dimension_numbers = #tpu.dot_dimension_numbers<[1], [0], [0], [1], [0, 0, 1, 1], [], []>} : vector<2x32xf32>, vector<32x8xf32>, vector<2x8xf32> -> vector<2x8xf32>
      %c0_14 = arith.constant 0 : index
      %c0_15 = arith.constant 0 : index
      %14 = vector.load %arg4[%c0_14, %c0_15] : memref<1x8xf32, #tpu.memory_space<vmem>>, vector<1x8xf32>
      %15 = vector.broadcast %14 : vector<1x8xf32> to vector<2x8xf32>
      %16 = arith.addf %13, %15 : vector<2x8xf32>
      %c0_16 = arith.constant 0 : index
      %c0_17 = arith.constant 0 : index
      %17 = vector.load %arg5[%c0_16, %c0_17] : memref<2x8xf32, #tpu.memory_space<vmem>>, vector<2x8xf32>
      tpu.vector_store %arg5[%c0_16, %c0_17], %16 {strides = array<i32>} : memref<2x8xf32, #tpu.memory_space<vmem>>, vector<2x8xf32>,
    } else {
    }
    return
  }
  func.func @transform_0(%arg0: i32, %arg1: i32) -> (i32, i32, i32) {
    %c0_i32 = arith.constant 0 : i32
    %c0_i32_0 = arith.constant 0 : i32
    return %arg0, %c0_i32, %arg1 : i32, i32, i32
  }
  func.func @transform_1(%arg0: i32, %arg1: i32) -> (i32, i32) {
    %c0_i32 = arith.constant 0 : i32
    %c0_i32_0 = arith.constant 0 : i32
    %c0_i32_1 = arith.constant 0 : i32
    return %c0_i32, %c0_i32_0 : i32, i32
  }
  func.func @transform_2(%arg0: i32, %arg1: i32) -> (i32, i32) {
    %c0_i32 = arith.constant 0 : i32
    %c0_i32_0 = arith.constant 0 : i32
    %c0_i32_1 = arith.constant 0 : i32
    return %c0_i32, %c0_i32_0 : i32, i32
  }
  func.func @transform_3(%arg0: i32, %arg1: i32) -> (i32, i32) {
    %c0_i32 = arith.constant 0 : i32
    %c0_i32_0 = arith.constant 0 : i32
    return %arg0, %c0_i32 : i32, i32
  }
}

</mosaic_0001>

<llo_original>
// kernel: tpu_custom_call.1
$region0: #{tpu_custom_call.1}
  #allocation0 [shape = 'u32[]', space=smem, size = 0x4, offset = 0x4, fixed_abs, tag = 'smem constant byte address 0x4 - core index']
  #allocation1 [shape = 'u32[72,128]{1,0:T(1,128)}', space=vmem, size = 0x9000, scoped, tag = 'internal scratch']
  #allocation2 [shape = 'f32[2,32]{1,0:T(2,128)}', space=vmem, size = 0x400, scoped, tag = 'scratch operand']
  %s0 = inlined_call_operand.hbm [shape: f32[2,32,256], index: 0, kind: input, shape index: {}]
  %s1 = inlined_call_operand.vmem [shape: f32[32,8], index: 1, kind: input, shape index: {}]
  %s2 = inlined_call_operand.vmem [shape: f32[1,8], index: 2, kind: input, shape index: {}]
  %s3 = inlined_call_operand.hbm [shape: f32[2,8], index: 3, kind: output, shape index: {}]
  %s4 = sld [smem:[#allocation0]]
  $region34: #{tpu_custom_call.1} parent=0
    _
  %s6 = ssub.s32 1, %s4
  %s7 = scalar_select 0, %s6, %s4
  $region1: #{tpu_custom_call.1} parent=0
    #allocation3 [shape = 'u8[65536]{0}', space=vmem, size = 0x10000, scoped, tag = 'input window, operand 0, single buffered']
    #allocation4 [shape = 's32[1]{0}', space=sflag, size = 0x4, scoped, tag = 'scoped memory for tpu_custom_call.1']
    #allocation5 [shape = 's32[1]{0}', space=sflag, size = 0x4, scoped, tag = 'scoped memory for tpu_custom_call.1']
    #allocation6 [shape = 'u8[1024]{0}', space=vmem, size = 0x400, scoped, tag = 'output window, operand 0, single buffered']
    %8 = vsyncpa [#allocation4], 0
    %9 = vsyncpa [#allocation5], 0
    // Predicated region
    $region2: #{tpu_custom_call.1} parent=1 // pred_check
      _
    $region3: #{tpu_custom_call.1} parent=1 // pred_check_branch
      %11 = sbr.rel (0) target = $region5
    $region4: #{tpu_custom_call.1} parent=1 // pred_region
      %13 = vsyncadd [#allocation4], 0
      %s14 = sshll.u32 %s0, 4
      %s15 = int_to_ptr.hbm [resolvable:$true] %s14
      %s16 = sshll.u32 [#allocation3], 4
      %s17 = int_to_ptr.vmem [resolvable:$true] %s16
      %22 = dma.hbm_to_vmem [thread:$0]  %s15, 2048, %s17, [#allocation4], 256, 256, 16
    $region5: #{tpu_custom_call.1} parent=1 // pred_fallthru
      _
    // Predicated region
    $region6: #{tpu_custom_call.1} parent=1 // pred_check
      _
    $region7: #{tpu_custom_call.1} parent=1 // pred_check_branch
      %24 = sbr.rel (0) target = $region9
    $region8: #{tpu_custom_call.1} parent=1 // pred_region
      _
    $region9: #{tpu_custom_call.1} parent=1 // pred_fallthru
      _
    // Predicated region
    $region10: #{tpu_custom_call.1} parent=1 // pred_check
      _
    $region11: #{tpu_custom_call.1} parent=1 // pred_check_branch
      %26 = sbr.rel (0) target = $region13
    $region12: #{tpu_custom_call.1} parent=1 // pred_region
      _
    $region13: #{tpu_custom_call.1} parent=1 // pred_fallthru
      _
    // Predicated region
    $region14: #{tpu_custom_call.1} parent=1 // pred_check
      _
    $region15: #{tpu_custom_call.1} parent=1 // pred_check_branch
      %28 = sbr.rel (0) target = $region17
    $region16: #{tpu_custom_call.1} parent=1 // pred_region
      %30 = dma.done [#allocation4], 2048
    $region17: #{tpu_custom_call.1} parent=1 // pred_fallthru
      _
    %p31 = scmp.eq.s32.totalorder 0, 0
    // Predicated region
    $region18: #{tpu_custom_call.1} parent=1 // pred_check
      %p32 = pneg %p31
    $region19: #{tpu_custom_call.1} parent=1 // pred_check_branch
      %34 = sbr.rel (%p32) target = $region21
    $region20: #{tpu_custom_call.1} parent=1 // pred_region
      %vm35 = vcmask 254976
      %36 = vst.msk [vmem:[#allocation2] sm:$0x3] %vm35, 0.0
    $region21: #{tpu_custom_call.1} parent=1 // pred_fallthru
      _
    %v37 = vld [vmem:[#allocation3] sm:$0xff]
    %v38 = vld [vmem:[#allocation3 + $0x8] sm:$0xff]
    %v39 = vld [vmem:[#allocation3 + $0x10] sm:$0xff]
    %v40 = vld [vmem:[#allocation3 + $0x18] sm:$0xff]
    %v41 = vld [vmem:[#allocation3 + $0x20] sm:$0xff]
    %v42 = vld [vmem:[#allocation3 + $0x28] sm:$0xff]
    %v43 = vld [vmem:[#allocation3 + $0x30] sm:$0xff]
    %v44 = vld [vmem:[#allocation3 + $0x38] sm:$0xff]
    %v45 = vld [vmem:[#allocation3 + $0x40] sm:$0xff]
    %v46 = vld [vmem:[#allocation3 + $0x48] sm:$0xff]
    %v47 = vld [vmem:[#allocation3 + $0x50] sm:$0xff]
    %v48 = vld [vmem:[#allocation3 + $0x58] sm:$0xff]
    %v49 = vld [vmem:[#allocation3 + $0x60] sm:$0xff]
    %v50 = vld [vmem:[#allocation3 + $0x68] sm:$0xff]
    %v51 = vld [vmem:[#allocation3 + $0x70] sm:$0xff]
    %v52 = vld [vmem:[#allocation3 + $0x78] sm:$0xff]
    %v53 = vld [vmem:[#allocation2] sm:$0x3]
    %v54 = vadd.f32 %v37, %v38
    %55 = vadd.xlane.f32.xlu0 %v54
    %v56 = vpop.xlane.xlu0 %55
    %v57 = vadd.f32 %v39, %v40
    %58 = vadd.xlane.f32.xlu0 %v57
    %v59 = vpop.xlane.xlu0 %58
    %v60 = vadd.f32 %v41, %v42
    %61 = vadd.xlane.f32.xlu0 %v60
    %v62 = vpop.xlane.xlu0 %61
    %v63 = vadd.f32 %v43, %v44
    %64 = vadd.xlane.f32.xlu0 %v63
    %v65 = vpop.xlane.xlu0 %64
    %v66 = vadd.f32 %v45, %v46
    %67 = vadd.xlane.f32.xlu0 %v66
    %v68 = vpop.xlane.xlu0 %67
    %v69 = vadd.f32 %v47, %v48
    %70 = vadd.xlane.f32.xlu0 %v69
    %v71 = vpop.xlane.xlu0 %70
    %v72 = vadd.f32 %v49, %v50
    %73 = vadd.xlane.f32.xlu0 %v72
    %v74 = vpop.xlane.xlu0 %73
    %v75 = vadd.f32 %v51, %v52
    %76 = vadd.xlane.f32.xlu0 %v75
    %v77 = vpop.xlane.xlu0 %76
    %v86 = vlaneseq
    %v87 = vand.u32 %v86, 127
    %v88 = vperm.slane %v56, %v87
    %v89 = vadd.s32 %v87, 4294967288
    %v90 = vperm.slane %v59, %v89
    %vm91 = vcmask 130112
    %v92 = vsel %vm91, %v90, %v88
    %v93 = vadd.s32 %v87, 4294967280
    %v94 = vperm.slane %v62, %v93
    %vm95 = vcmask 195712
    %v96 = vsel %vm95, %v94, %v92
    %v97 = vadd.s32 %v87, 4294967272
    %v98 = vperm.slane %v65, %v97
    %vm99 = vcmask 261312
    %v100 = vsel %vm99, %v98, %v96
    %v101 = vperm.slane %v68, %v87
    %v102 = vperm.slane %v71, %v89
    %v103 = vsel %vm91, %v102, %v101
    %v104 = vperm.slane %v74, %v93
    %v105 = vsel %vm95, %v104, %v103
    %v106 = vperm.slane %v77, %v97
    %v107 = vsel %vm99, %v106, %v105
    %vm108 = vcmask 1041409
    %v109 = vsel %vm108, %v107, %v100
    %v111 = vadd.f32 %v53, %v109
    %vm112 = vcmask 254976
    %113 = vst.msk [vmem:[#allocation2] sm:$0x3] %vm112, %v111
    // Predicated region
    $region22: #{tpu_custom_call.1} parent=1 // pred_check
      %p114 = pneg %p31
    $region23: #{tpu_custom_call.1} parent=1 // pred_check_branch
      %116 = sbr.rel (%p114) target = $region25
    $region24: #{tpu_custom_call.1} parent=1 // pred_region
      %v117 = vld [vmem:[#allocation2] sm:$0x3]
      %v118 = vld [vmem:[%s1] sm:$0xff]
      %v119 = vld [vmem:[%s1 + $0x8] sm:$0xff]
      %v120 = vld [vmem:[%s1 + $0x10] sm:$0xff]
      %v121 = vld [vmem:[%s1 + $0x18] sm:$0xff]
      %v122 = vld [vmem:[%s2] sm:$0x1]
      %v124 = vperm.slane %v122, 0
      %vm126 = vcmask 261120
      %v128 = vsel %vm126, %v117, 0
      %130 = vmatpush.msra.mxu0 0.0
      %131 = vmatpush.msra.mxu0 0.0
      %132 = vmatpush.msra.mxu0 0.0
      %133 = vmatpush.msra.mxu0 0.0
      %134 = vmatpush.msra.mxu0 0.0
      %135 = vmatpush.msra.mxu0 0.0
      %136 = vmatpush.msra.mxu0 0.0
      %137 = vmatpush.msra.mxu0 0.0
      %138 = vmatpush.msra.mxu0 0.0
      %139 = vmatpush.msra.mxu0 0.0
      %140 = vmatpush.msra.mxu0 0.0
      %141 = vmatpush.msra.mxu0 0.0
      %142 = vmatpush.msra.mxu0 %v121
      %143 = vmatpush.msra.mxu0 %v120
      %144 = vmatpush.msra.mxu0 %v119
      %145 = vmatpush.msra.mxu0 %v118
      %146 = vmatmul.f32.gmra.mxu0 %v128
      %v147 = vpop.f32.mrf.mxu0
      %v148 = vadd.f32 %v124, %v147
      %149 = vdwg.mxu0
      %vm150 = vcmask 58368
      %151 = vst.msk [vmem:[#allocation6] sm:$0x3] %vm150, %v148
    $region25: #{tpu_custom_call.1} parent=1 // pred_fallthru
      _
    // Predicated region
    $region26: #{tpu_custom_call.1} parent=1 // pred_check
      _
    $region27: #{tpu_custom_call.1} parent=1 // pred_check_branch
      %153 = sbr.rel (0) target = $region29
    $region28: #{tpu_custom_call.1} parent=1 // pred_region
      %155 = vsyncadd [#allocation5], 0
      %s157 = sshll.u32 [#allocation6], 4
      %s158 = int_to_ptr.vmem [resolvable:$true] %s157
      %s159 = sshll.u32 %s3, 4
      %s160 = int_to_ptr.hbm [resolvable:$true] %s159
      %162 = dma.vmem_to_hbm [thread:$0]  %s158, 32, %s160, [#allocation5]
    $region29: #{tpu_custom_call.1} parent=1 // pred_fallthru
      _
    // Predicated region
    $region30: #{tpu_custom_call.1} parent=1 // pred_check
      _
    $region31: #{tpu_custom_call.1} parent=1 // pred_check_branch
      %164 = sbr.rel (0) target = $region33
    $region32: #{tpu_custom_call.1} parent=1 // pred_region
      %166 = dma.done [#allocation5], 32
    $region33: #{tpu_custom_call.1} parent=1 // pred_fallthru
      _
    %167 = vsyncpa [#allocation4], 1
    %168 = vsyncpa [#allocation5], 1

</llo_original>
